<compile_context>
chip_gen: v6e
topology: v6e:2x2x1
jax: 0.10.0
libtpu: 0.0.40
codegen_flags: <defaults>
</compile_context>

<pallas_src>
import jax
import jax.numpy as jnp
from jax.experimental import pallas as pl
from jax.experimental.pallas import tpu as pltpu


# --------------------------------- Pallas kernel ---------------------------------

def _max_transformer_kernel(a_ref, b_ref, bias_ref, wrel_ref, out_ref):
    """One batch-tile grid step.

    a_ref   : (TB, AR, W, C)  A[b,a,o,j]  = X[b,j] @ W_row[:, a*W+o]   (cells on lanes)
    b_ref   : (TB, AR, W, C)  Bi[b,a,o,i] = X[b,i] @ W_col[:, a*W+o]
    bias_ref: (1, AR, W, 1)   lin_bias * bias_factor
    wrel_ref: (1, AR, W, 1)   weight of the i==j indicator feature
    out_ref : (TB, W, C)      out[b,o,i]  (transposed to (B, C, W) in the wrapper)
    """
    a = a_ref[...]
    bi = b_ref[...]
    bias = bias_ref[...]
    wrel = wrel_ref[...]

    num_cells = a.shape[-1]
    arity = a.shape[1]

    # Top-2 over j (lane axis): max, first argmax, and max excluding that argmax.
    m1 = jnp.max(a, axis=-1, keepdims=True)                            # (TB,AR,W,1)
    lane = jax.lax.broadcasted_iota(jnp.int32, a.shape, a.ndim - 1)    # (TB,AR,W,C)
    am = jnp.min(jnp.where(a == m1, lane, num_cells),
                 axis=-1, keepdims=True)                               # first argmax
    m2 = jnp.max(jnp.where(lane == am, -jnp.inf, a),
                 axis=-1, keepdims=True)                               # runner-up

    # max over j of  A[j] + (i==j)*w_rel,  for every i (the lane index):
    #     = max( max_{j!=i} A[j], A[i] + w_rel )
    excl = jnp.where(lane == am, m2, m1)                               # max_{j!=i} A[j]
    col = jnp.maximum(excl, a + wrel)                                  # (TB,AR,W,C)

    z = col + bi + bias                                                # (TB,AR,W,C)

    # TODO(synk): HighOrderActivationA stand-in — max-out over the `arity` groups.
    y = z[:, 0]
    for ar in range(1, arity):
        y = jnp.maximum(y, z[:, ar])                                   # (TB,W,C)

    out_ref[...] = y.astype(out_ref.dtype)


# ----------------------------------- wrapper --------------------------------------

def _pick_batch_tile(batch, arity, wout, num_cells, budget_bytes):
    # Per-step live f32 bytes: double-buffered A & Bi input blocks + output block.
    per_b = 4 * (2 * 2 * arity * wout * num_cells + 2 * wout * num_cells)
    tb = 1
    for t in range(1, batch + 1):
        if batch % t == 0 and t * per_b <= budget_bytes:
            tb = t
    return tb


def max_transformer_forward(x, params, *, cell_out_width, arity,
                            bias_factor=1.0, batch_tile=None):
    """Pallas forward for MaxTransformer (eval mode)."""
    x = x.astype(jnp.float32)
    B, C, cin = x.shape
    D = 2 * cin + 1
    W = cell_out_width
    F = W * arity

    # L1Linear effective weights: pos - neg rows of the Simplex parameter.
    wpn = params["lin_w_pos_neg"].astype(jnp.float32)                  # (2D, F)
    w = wpn[:D, :] - wpn[D:, :]                                        # (D, F)
    w_rowcol = jnp.concatenate([w[:cin, :], w[cin:2 * cin, :]], axis=1)  # (cin, 2F)
    w_rel = w[2 * cin, :]                                              # (F,)
    bias_eff = params["lin_bias"].astype(jnp.float32) * bias_factor    # (F,)

    # Hoisted projection: one (B*C, cin) @ (cin, 2F) matmul in XLA.
    ab = jnp.dot(x.reshape(B * C, cin), w_rowcol,
                 precision=jax.lax.Precision.HIGHEST)                  # (B*C, 2F)
    ab = ab.reshape(B, C, 2, arity, W)
    # (B, C, 2, AR, W) -> (2, B, AR, W, C): put the cell axis on lanes.
    ab = jnp.transpose(ab, (2, 0, 3, 4, 1))
    a_term = ab[0]                      # (B, AR, W, C): j-indexed term (X_row part)
    b_term = ab[1]                      # (B, AR, W, C): i-indexed term (X_col part)

    bias4 = bias_eff.reshape(1, arity, W, 1)
    wrel4 = w_rel.reshape(1, arity, W, 1)

    # Batch-tile from an explicit VMEM byte budget (safe on v5e/v6e/v7x).
    if batch_tile is None:
        batch_tile = _pick_batch_tile(B, arity, W, C, budget_bytes=8 * 1024 * 1024)
    assert B % batch_tile == 0, "batch must be divisible by batch_tile"
    grid = (B // batch_tile,)

    out_t = pl.pallas_call(
        _max_transformer_kernel,
        out_shape=jax.ShapeDtypeStruct((B, W, C), jnp.float32),
        grid_spec=pltpu.PrefetchScalarGridSpec(
            num_scalar_prefetch=0,
            grid=grid,
            in_specs=[
                pl.BlockSpec((batch_tile, arity, W, C), lambda g: (g, 0, 0, 0)),
                pl.BlockSpec((batch_tile, arity, W, C), lambda g: (g, 0, 0, 0)),
                pl.BlockSpec((1, arity, W, 1), lambda g: (0, 0, 0, 0)),  # resident
                pl.BlockSpec((1, arity, W, 1), lambda g: (0, 0, 0, 0)),  # resident
            ],
            out_specs=pl.BlockSpec((batch_tile, W, C), lambda g: (g, 0, 0)),
        ),
        compiler_params=pltpu.CompilerParams(
            dimension_semantics=("parallel",),
            vmem_limit_bytes=32 * 1024 * 1024),
    )(a_term, b_term, bias4, wrel4)

    # (B, W, C) -> (B, C, W): lane-dense store in the kernel, one transpose in XLA.
    return jnp.transpose(out_t, (0, 2, 1))


# ------------------------- deterministic parameter init -------------------------

def _simplex_init(key, shape, dim):
    # Mirrors Simplex.__init__: rand -> log(.+1e-15) -> normalize by sum along `dim`.
    data = jax.random.uniform(key, shape, dtype=jnp.float32)
    data = jnp.log(data + 1e-15)
    data = data / jnp.expand_dims(jnp.sum(data, axis=dim), dim)
    return data


def init_params(key, cell_in_width, cell_out_width, arity):
    D = 2 * cell_in_width + 1
    F = cell_out_width * arity
    k_w, k_b = jax.random.split(key)
    # PyTorch initializes lin_bias to zeros; a small nonzero bias is used here so the
    # bias path of the kernel is actually exercised by the correctness check.
    return {
        "lin_w_pos_neg": _simplex_init(k_w, (2 * D, F), dim=0),
        "lin_bias": 0.1 * jax.random.normal(k_b, (F,), dtype=jnp.float32),
    }


# --------------------------- pure-JAX reference model ---------------------------

def reference_forward(x, params, *, cell_out_width, arity, bias_factor=1.0):
    """Literal translation of MaxTransformer.forward (same activation stand-in)."""
    x = x.astype(jnp.float32)
    B, C, cin = x.shape
    D = 2 * cin + 1
    wpn = params["lin_w_pos_neg"].astype(jnp.float32)
    w = wpn[:D, :] - wpn[D:, :]
    bias = params["lin_bias"].astype(jnp.float32)

    x_row = jnp.broadcast_to(x[:, None, :, :], (B, C, C, cin))   # X[b, j, :]
    x_col = jnp.broadcast_to(x[:, :, None, :], (B, C, C, cin))   # X[b, i, :]
    x_rel = jnp.broadcast_to(jnp.eye(C, dtype=jnp.float32)[None, :, :, None],
                             (B, C, C, 1))
    x_cat = jnp.concatenate([x_row, x_col, x_rel], axis=3).reshape(B * C * C, D)
    z = jnp.dot(x_cat, w, precision=jax.lax.Precision.HIGHEST) + bias[None, :] * bias_factor
    # Same HighOrderActivationA stand-in as the kernel (see TODO(synk) above).
    y = jnp.max(z.reshape(B * C * C, arity, cell_out_width), axis=1)
    y = y.reshape(B, C, C, cell_out_width)
    return jnp.max(y, axis=2)


# ------------------------------------- main --------------------------------------

if __name__ == "__main__":
    configs = [
        # (batch, cells, cin, cell_out_width, arity, bias_factor, batch_tile)
        dict(batch=2, num_cells=16, cell_in_width=4, cell_out_width=8, arity=2,
             bias_factor=1.0, batch_tile=1),     # multi-step grid -> exercises index maps
        dict(batch=3, num_cells=24, cell_in_width=5, cell_out_width=6, arity=3,
             bias_factor=0.5, batch_tile=None),  # auto batch-tiling, odd sizes
    ]

    key = jax.random.PRNGKey(0)
    for cfg in configs:
        key, k_x, k_p = jax.random.split(key, 3)
        x = jax.random.normal(
            k_x, (cfg["batch"], cfg["num_cells"], cfg["cell_in_width"]),
            dtype=jnp.float32)
        params = init_params(k_p, cfg["cell_in_width"], cfg["cell_out_width"],
                             cfg["arity"])

        out = jax.block_until_ready(max_transformer_forward(
            x, params, cell_out_width=cfg["cell_out_width"], arity=cfg["arity"],
            bias_factor=cfg["bias_factor"], batch_tile=cfg["batch_tile"]))

        ref = reference_forward(
            x, params, cell_out_width=cfg["cell_out_width"], arity=cfg["arity"],
            bias_factor=cfg["bias_factor"])

        assert out.shape == (cfg["batch"], cfg["num_cells"], cfg["cell_out_width"])
        err = float(jnp.max(jnp.abs(out - ref)))
        assert jnp.allclose(out, ref, atol=1e-3, rtol=1e-3), f"max abs err = {err}"

    print("KERNEL_OK")
</pallas_src>

<mosaic_0001>
module attributes {stable_mosaic.version = 11 : i64} {
  func.func @_max_transformer_kernel(%arg0: i32, %arg1: memref<1x2x8x16xf32, #tpu.memory_space<vmem>>, %arg2: memref<1x2x8x16xf32, #tpu.memory_space<vmem>>, %arg3: memref<1x2x8x1xf32, #tpu.memory_space<vmem>>, %arg4: memref<1x2x8x1xf32, #tpu.memory_space<vmem>>, %arg5: memref<1x8x16xf32, #tpu.memory_space<vmem>>) attributes {dimension_semantics = [#tpu.dimension_semantics<parallel>], iteration_bounds = array<i64: 2>, scalar_prefetch = 0 : i64, scratch_operands = 0 : i64, tpu.core_type = #tpu.core_type<tc>, window_params = [{transform_indices = @transform_0, window_bounds = array<i64: 1, 2, 8, 16>}, {transform_indices = @transform_1, window_bounds = array<i64: 1, 2, 8, 16>}, {pipeline_mode = #tpu.pipeline_mode<synchronous>, transform_indices = @transform_2, window_bounds = array<i64: 1, 2, 8, 1>}, {pipeline_mode = #tpu.pipeline_mode<synchronous>, transform_indices = @transform_3, window_bounds = array<i64: 1, 2, 8, 1>}, {transform_indices = @transform_4, window_bounds = array<i64: 1, 8, 16>}]} {
    %c0 = arith.constant 0 : index
    %c0_0 = arith.constant 0 : index
    %c0_1 = arith.constant 0 : index
    %c0_2 = arith.constant 0 : index
    %0 = vector.load %arg1[%c0, %c0_0, %c0_1, %c0_2] : memref<1x2x8x16xf32, #tpu.memory_space<vmem>>, vector<1x2x8x16xf32>
    %c0_3 = arith.constant 0 : index
    %c0_4 = arith.constant 0 : index
    %c0_5 = arith.constant 0 : index
    %c0_6 = arith.constant 0 : index
    %1 = vector.load %arg2[%c0_3, %c0_4, %c0_5, %c0_6] : memref<1x2x8x16xf32, #tpu.memory_space<vmem>>, vector<1x2x8x16xf32>
    %c0_7 = arith.constant 0 : index
    %c0_8 = arith.constant 0 : index
    %c0_9 = arith.constant 0 : index
    %c0_10 = arith.constant 0 : index
    %2 = vector.load %arg3[%c0_7, %c0_8, %c0_9, %c0_10] : memref<1x2x8x1xf32, #tpu.memory_space<vmem>>, vector<1x2x8x1xf32>
    %c0_11 = arith.constant 0 : index
    %c0_12 = arith.constant 0 : index
    %c0_13 = arith.constant 0 : index
    %c0_14 = arith.constant 0 : index
    %3 = vector.load %arg4[%c0_11, %c0_12, %c0_13, %c0_14] : memref<1x2x8x1xf32, #tpu.memory_space<vmem>>, vector<1x2x8x1xf32>
    %cst = arith.constant dense<0xFF800000> : vector<1x2x8xf32>
    %4 = vector.multi_reduction <maximumf>, %0, %cst [3] : vector<1x2x8x16xf32> to vector<1x2x8xf32>
    %5 = vector.shape_cast %4 : vector<1x2x8xf32> to vector<1x2x8x1xf32>
    %6 = tpu.iota {dimensions = array<i32: 3>} : vector<1x2x8x16xi32>
    %7 = vector.broadcast %5 : vector<1x2x8x1xf32> to vector<1x2x8x16xf32>
    %8 = arith.cmpf oeq, %0, %7 : vector<1x2x8x16xf32>
    %c16_i32 = arith.constant 16 : i32
    %9 = vector.broadcast %c16_i32 : i32 to vector<1x2x8x16xi32>
    %10 = arith.select %8, %6, %9 : vector<1x2x8x16xi1>, vector<1x2x8x16xi32>
    %cst_15 = arith.constant dense<2147483647> : vector<1x2x8xi32>
    %11 = vector.multi_reduction <minsi>, %10, %cst_15 [3] : vector<1x2x8x16xi32> to vector<1x2x8xi32>
    %12 = vector.shape_cast %11 : vector<1x2x8xi32> to vector<1x2x8x1xi32>
    %13 = vector.broadcast %12 : vector<1x2x8x1xi32> to vector<1x2x8x16xi32>
    %14 = arith.cmpi eq, %6, %13 : vector<1x2x8x16xi32>
    %cst_16 = arith.constant 0xFF800000 : f32
    %15 = vector.broadcast %cst_16 : f32 to vector<1x2x8x16xf32>
    %16 = arith.select %14, %15, %0 : vector<1x2x8x16xi1>, vector<1x2x8x16xf32>
    %cst_17 = arith.constant dense<0xFF800000> : vector<1x2x8xf32>
    %17 = vector.multi_reduction <maximumf>, %16, %cst_17 [3] : vector<1x2x8x16xf32> to vector<1x2x8xf32>
    %18 = vector.shape_cast %17 : vector<1x2x8xf32> to vector<1x2x8x1xf32>
    %19 = vector.broadcast %12 : vector<1x2x8x1xi32> to vector<1x2x8x16xi32>
    %20 = arith.cmpi eq, %6, %19 : vector<1x2x8x16xi32>
    %21 = vector.shape_cast %18 : vector<1x2x8x1xf32> to vector<1x2x8x1xf32>
    %22 = vector.broadcast %21 : vector<1x2x8x1xf32> to vector<1x2x8x16xf32>
    %23 = vector.shape_cast %5 : vector<1x2x8x1xf32> to vector<1x2x8x1xf32>
    %24 = vector.broadcast %23 : vector<1x2x8x1xf32> to vector<1x2x8x16xf32>
    %25 = arith.select %20, %22, %24 : vector<1x2x8x16xi1>, vector<1x2x8x16xf32>
    %26 = vector.broadcast %3 : vector<1x2x8x1xf32> to vector<1x2x8x16xf32>
    %27 = arith.addf %0, %26 : vector<1x2x8x16xf32>
    %28 = arith.maximumf %25, %27 : vector<1x2x8x16xf32>
    %29 = arith.addf %28, %1 : vector<1x2x8x16xf32>
    %30 = vector.broadcast %2 : vector<1x2x8x1xf32> to vector<1x2x8x16xf32>
    %31 = arith.addf %29, %30 : vector<1x2x8x16xf32>
    %32 = vector.extract_strided_slice %31 {offsets = [0, 0, 0, 0], sizes = [1, 1, 8, 16], strides = [1, 1, 1, 1]} : vector<1x2x8x16xf32> to vector<1x1x8x16xf32>
    %33 = vector.shape_cast %32 : vector<1x1x8x16xf32> to vector<1x8x16xf32>
    %34 = vector.extract_strided_slice %31 {offsets = [0, 1, 0, 0], sizes = [1, 1, 8, 16], strides = [1, 1, 1, 1]} : vector<1x2x8x16xf32> to vector<1x1x8x16xf32>
    %35 = vector.shape_cast %34 : vector<1x1x8x16xf32> to vector<1x8x16xf32>
    %36 = arith.maximumf %33, %35 : vector<1x8x16xf32>
    %c0_18 = arith.constant 0 : index
    %c0_19 = arith.constant 0 : index
    %c0_20 = arith.constant 0 : index
    %37 = vector.load %arg5[%c0_18, %c0_19, %c0_20] : memref<1x8x16xf32, #tpu.memory_space<vmem>>, vector<1x8x16xf32>
    tpu.vector_store %arg5[%c0_18, %c0_19, %c0_20], %36 {strides = array<i32>} : memref<1x8x16xf32, #tpu.memory_space<vmem>>, vector<1x8x16xf32>,
    return
  }
  func.func @transform_0(%arg0: i32) -> (i32, i32, i32, i32) {
    %c0_i32 = arith.constant 0 : i32
    %c0_i32_0 = arith.constant 0 : i32
    %c0_i32_1 = arith.constant 0 : i32
    %c0_i32_2 = arith.constant 0 : i32
    return %arg0, %c0_i32, %c0_i32_0, %c0_i32_1 : i32, i32, i32, i32
  }
  func.func @transform_1(%arg0: i32) -> (i32, i32, i32, i32) {
    %c0_i32 = arith.constant 0 : i32
    %c0_i32_0 = arith.constant 0 : i32
    %c0_i32_1 = arith.constant 0 : i32
    %c0_i32_2 = arith.constant 0 : i32
    return %arg0, %c0_i32, %c0_i32_0, %c0_i32_1 : i32, i32, i32, i32
  }
  func.func @transform_2(%arg0: i32) -> (i32, i32, i32, i32) {
    %c0_i32 = arith.constant 0 : i32
    %c0_i32_0 = arith.constant 0 : i32
    %c0_i32_1 = arith.constant 0 : i32
    %c0_i32_2 = arith.constant 0 : i32
    %c0_i32_3 = arith.constant 0 : i32
    return %c0_i32, %c0_i32_0, %c0_i32_1, %c0_i32_2 : i32, i32, i32, i32
  }
  func.func @transform_3(%arg0: i32) -> (i32, i32, i32, i32) {
    %c0_i32 = arith.constant 0 : i32
    %c0_i32_0 = arith.constant 0 : i32
    %c0_i32_1 = arith.constant 0 : i32
    %c0_i32_2 = arith.constant 0 : i32
    %c0_i32_3 = arith.constant 0 : i32
    return %c0_i32, %c0_i32_0, %c0_i32_1, %c0_i32_2 : i32, i32, i32, i32
  }
  func.func @transform_4(%arg0: i32) -> (i32, i32, i32) {
    %c0_i32 = arith.constant 0 : i32
    %c0_i32_0 = arith.constant 0 : i32
    %c0_i32_1 = arith.constant 0 : i32
    return %arg0, %c0_i32, %c0_i32_0 : i32, i32, i32
  }
}

</mosaic_0001>

<llo_original>
// kernel: tpu_custom_call.1
$region0: #{tpu_custom_call.1}
  #allocation0 [shape = 'u32[]', space=smem, size = 0x4, offset = 0x4, fixed_abs, tag = 'smem constant byte address 0x4 - core index']
  #allocation1 [shape = 'u32[144,128]{1,0:T(1,128)}', space=vmem, size = 0x12000, scoped, tag = 'internal scratch']
  %s0 = inlined_call_operand.vmem [shape: f32[2,2,8,16], index: 0, kind: input, shape index: {}]
  %s1 = inlined_call_operand.hbm [shape: f32[2,2,8,16], index: 1, kind: input, shape index: {}]
  %s2 = inlined_call_operand.vmem [shape: f32[1,2,8,1], index: 2, kind: input, shape index: {}]
  %s3 = inlined_call_operand.vmem [shape: f32[1,2,8,1], index: 3, kind: input, shape index: {}]
  %s4 = inlined_call_operand.hbm [shape: f32[2,8,16], index: 4, kind: output, shape index: {}]
  %s5 = sld [smem:[#allocation0]]
  $region53: #{tpu_custom_call.1} parent=0
    _
  %s7 = ssub.s32 1, %s5
  %s8 = scalar_select 0, %s7, %s5
  $region1: #{tpu_custom_call.1} parent=0
    #allocation2 [shape = 'u8[16384]{0}', space=vmem, size = 0x4000, scoped, tag = 'input window, operand 1']
    #allocation3 [shape = 's32[2]{0}', space=sflag, size = 0x8, scoped, tag = 'scoped memory for tpu_custom_call.1']
    #allocation4 [shape = 's32[2]{0}', space=sflag, size = 0x8, scoped, tag = 'scoped memory for tpu_custom_call.1']
    #allocation5 [shape = 'u8[8192]{0}', space=vmem, size = 0x2000, scoped, tag = 'output window, operand 0']
    %9 = vsyncpa [#allocation3], 0
    %s10 = scalar_lea.sflag [#allocation3], 1
    %11 = vsyncpa %s10, 0
    %12 = vsyncpa [#allocation4], 0
    %s13 = scalar_lea.sflag [#allocation4], 1
    %14 = vsyncpa %s13, 0
    loop: start=0, step=1, limit=4
    $region2: #{tpu_custom_call.1} parent=1 // loop_pre_header
      _
    $region3: #{tpu_custom_call.1} parent=1 // loop_header
      %s16 = sphi 0, %s20
      %p17 = scmp.ge.s32.totalorder %s16, 4
      %s26 = sphi 0, %s28
      %s29 = sphi 0, %s26
      %s30 = sphi 0, %s29
      %s46 = sphi 0, %s30
      %s52 = sphi 0, %s54
      %s55 = sphi 0, %s52
      %s56 = sphi 0, %s55
      %s72 = sphi 0, %s56
      %s76 = sphi 0, %s76
      %s78 = sphi 0, %s76
      %s79 = sphi 0, %s78
      %s93 = sphi 0, %s79
      %s97 = sphi 0, %s97
      %s99 = sphi 0, %s97
      %s100 = sphi 0, %s99
      %s114 = sphi 0, %s100
      %s120 = sphi 0, %s122
      %s123 = sphi 0, %s120
      %s124 = sphi 0, %s123
      %s140 = sphi 0, %s124
    $region4: #{tpu_custom_call.1} parent=1 // loop_header_branch
      %19 = sbr.rel (%p17) target = $region8
    $region5: #{tpu_custom_call.1} parent=1 // loop_body
      %s21 = ssub.s32 %s16, 1
      %s22 = ssub.s32 %s16, 2
      %s23 = sadd.s32 %s16, 1
      %s24 = ssub.s32 %s16, %s23
      %p25 = scmp.eq.s32.totalorder %s24, 0
      %s27 = sadd.s32 %s26, 1
      %s28 = scalar_select %p25, %s26, %s27
      %p31 = pneg %p25
      %p32 = scmp.eq.s32.totalorder %s16, 1
      %p33 = por %p31, %p32
      %p34 = scmp.ne.s32.totalorder %s26, %s29
      %p35 = scmp.eq.s32.totalorder %s16, 0
      %p36 = por %p34, %p35
      %p37 = scmp.ne.s32.totalorder %s26, %s29
      %p38 = scmp.eq.s32.totalorder %s21, 1
      %p39 = por %p37, %p38
      %p40 = scmp.ne.s32.totalorder %s29, %s30
      %p41 = scmp.eq.s32.totalorder %s21, 0
      %p42 = por %p40, %p41
      %p43 = scmp.ne.s32.totalorder %s29, %s30
      %p44 = scmp.eq.s32.totalorder %s22, 1
      %p45 = por %p43, %p44
      %p47 = scmp.ne.s32.totalorder %s30, %s46
      %p48 = scmp.eq.s32.totalorder %s22, 0
      %p49 = por %p47, %p48
      %s50 = ssub.s32 %s16, %s23
      %p51 = scmp.eq.s32.totalorder %s50, 0
      %s53 = sadd.s32 %s52, 1
      %s54 = scalar_select %p51, %s52, %s53
      %p57 = pneg %p51
      %p58 = scmp.eq.s32.totalorder %s16, 1
      %p59 = por %p57, %p58
      %p60 = scmp.ne.s32.totalorder %s52, %s55
      %p61 = scmp.eq.s32.totalorder %s16, 0
      %p62 = por %p60, %p61
      %p63 = scmp.ne.s32.totalorder %s52, %s55
      %p64 = scmp.eq.s32.totalorder %s21, 1
      %p65 = por %p63, %p64
      %p66 = scmp.ne.s32.totalorder %s55, %s56
      %p67 = scmp.eq.s32.totalorder %s21, 0
      %p68 = por %p66, %p67
      %p69 = scmp.ne.s32.totalorder %s55, %s56
      %p70 = scmp.eq.s32.totalorder %s22, 1
      %p71 = por %p69, %p70
      %p73 = scmp.ne.s32.totalorder %s56, %s72
      %p74 = scmp.eq.s32.totalorder %s22, 0
      %p75 = por %p73, %p74
      %s77 = sadd.s32 %s76, 1
      %p80 = scmp.eq.s32.totalorder %s16, 1
      %p81 = scmp.ne.s32.totalorder %s76, %s78
      %p82 = scmp.eq.s32.totalorder %s16, 0
      %p83 = por %p81, %p82
      %p84 = scmp.ne.s32.totalorder %s76, %s78
      %p85 = scmp.eq.s32.totalorder %s21, 1
      %p86 = por %p84, %p85
      %p87 = scmp.ne.s32.totalorder %s78, %s79
      %p88 = scmp.eq.s32.totalorder %s21, 0
      %p89 = por %p87, %p88
      %p90 = scmp.ne.s32.totalorder %s78, %s79
      %p91 = scmp.eq.s32.totalorder %s22, 1
      %p92 = por %p90, %p91
      %p94 = scmp.ne.s32.totalorder %s79, %s93
      %p95 = scmp.eq.s32.totalorder %s22, 0
      %p96 = por %p94, %p95
      %s98 = sadd.s32 %s97, 1
      %p101 = scmp.eq.s32.totalorder %s16, 1
      %p102 = scmp.ne.s32.totalorder %s97, %s99
      %p103 = scmp.eq.s32.totalorder %s16, 0
      %p104 = por %p102, %p103
      %p105 = scmp.ne.s32.totalorder %s97, %s99
      %p106 = scmp.eq.s32.totalorder %s21, 1
      %p107 = por %p105, %p106
      %p108 = scmp.ne.s32.totalorder %s99, %s100
      %p109 = scmp.eq.s32.totalorder %s21, 0
      %p110 = por %p108, %p109
      %p111 = scmp.ne.s32.totalorder %s99, %s100
      %p112 = scmp.eq.s32.totalorder %s22, 1
      %p113 = por %p111, %p112
      %p115 = scmp.ne.s32.totalorder %s100, %s114
      %p116 = scmp.eq.s32.totalorder %s22, 0
      %p117 = por %p115, %p116
      %s118 = ssub.s32 %s16, %s23
      %p119 = scmp.eq.s32.totalorder %s118, 0
      %s121 = sadd.s32 %s120, 1
      %s122 = scalar_select %p119, %s120, %s121
      %p125 = pneg %p119
      %p126 = scmp.eq.s32.totalorder %s16, 1
      %p127 = por %p125, %p126
      %p128 = scmp.ne.s32.totalorder %s120, %s123
      %p129 = scmp.eq.s32.totalorder %s16, 0
      %p130 = por %p128, %p129
      %p131 = scmp.ne.s32.totalorder %s120, %s123
      %p132 = scmp.eq.s32.totalorder %s21, 1
      %p133 = por %p131, %p132
      %p134 = scmp.ne.s32.totalorder %s123, %s124
      %p135 = scmp.eq.s32.totalorder %s21, 0
      %p136 = por %p134, %p135
      %p137 = scmp.ne.s32.totalorder %s123, %s124
      %p138 = scmp.eq.s32.totalorder %s22, 1
      %p139 = por %p137, %p138
      %p141 = scmp.ne.s32.totalorder %s124, %s140
      %p142 = scmp.eq.s32.totalorder %s22, 0
      %p143 = por %p141, %p142
      %p144 = scmp.le.s32.totalorder 1, %s16
      %p145 = scmp.lt.s32.totalorder %s16, 3
      %p146 = pnand %p144, %p145
      %p147 = pneg %p146
      // Predicated region
      $region9: #{tpu_custom_call.1} parent=5 // pred_check
        _
      $region10: #{tpu_custom_call.1} parent=5 // pred_check_branch
        %149 = sbr.rel (%p146) target = $region12
      $region11: #{tpu_custom_call.1} parent=5 // pred_region
        %s150 = ssub.s32 %s16, 1
        // Predicated region
        $region13: #{tpu_custom_call.1} parent=11 // pred_check
          %p151 = pneg %p89
        $region14: #{tpu_custom_call.1} parent=11 // pred_check_branch
          %153 = sbr.rel (%p151) target = $region16
        $region15: #{tpu_custom_call.1} parent=11 // pred_region
          _
        $region16: #{tpu_custom_call.1} parent=11 // pred_fallthru
          _
        // Predicated region
        $region17: #{tpu_custom_call.1} parent=11 // pred_check
          %p154 = pneg %p110
        $region18: #{tpu_custom_call.1} parent=11 // pred_check_branch
          %156 = sbr.rel (%p154) target = $region20
        $region19: #{tpu_custom_call.1} parent=11 // pred_region
          _
        $region20: #{tpu_custom_call.1} parent=11 // pred_fallthru
          _
      $region12: #{tpu_custom_call.1} parent=5 // pred_fallthru
        _
      %p157 = scmp.lt.s32.totalorder %s16, 2
      // Predicated region
      $region21: #{tpu_custom_call.1} parent=5 // pred_check
        %p158 = pneg %p157
      $region22: #{tpu_custom_call.1} parent=5 // pred_check_branch
        %160 = sbr.rel (%p158) target = $region24
      $region23: #{tpu_custom_call.1} parent=5 // pred_region
        // Predicated region
        $region25: #{tpu_custom_call.1} parent=23 // pred_check
          %p161 = pneg %p36
        $region26: #{tpu_custom_call.1} parent=23 // pred_check_branch
          %163 = sbr.rel (%p161) target = $region28
        $region27: #{tpu_custom_call.1} parent=23 // pred_region
          %p164 = scmp.lt.s32.totalorder %s16, 1
          %s165 = scalar_select %p164, %s16, 1
          %s166 = smul.addr %s165, 2
          %s167 = smul.addr %s166, 8
          %s168 = scalar_lea.vmem %s0, %s167
        $region28: #{tpu_custom_call.1} parent=23 // pred_fallthru
          _
        // Predicated region
        $region29: #{tpu_custom_call.1} parent=23 // pred_check
          %p169 = pneg %p62
        $region30: #{tpu_custom_call.1} parent=23 // pred_check_branch
          %171 = sbr.rel (%p169) target = $region32
        $region31: #{tpu_custom_call.1} parent=23 // pred_region
          %s172 = sand.u32 %s52, 1
          %s173 = scalar_lea.sflag [#allocation3], %s172
          %s174 = sand.u32 %s52, 1
          %s175 = smul.addr %s174, 16
          %s176 = scalar_lea.vmem [#allocation2], %s175
          %s178 = ssub.s32 256, 256
          %179 = vsyncadd %s173, %s178
          %s180 = smul.addr %s16, 2
          %s181 = smul.addr %s180, 128
          %s182 = scalar_lea.hbm %s1, %s181
          %s183 = sshll.u32 %s176, 4
          %s184 = int_to_ptr.vmem [resolvable:$true] %s183
          %189 = dma.hbm_to_vmem [thread:$0]  %s182, 256, %s184, %s173, 128, 128, 8
        $region32: #{tpu_custom_call.1} parent=23 // pred_fallthru
          _
      $region24: #{tpu_custom_call.1} parent=5 // pred_fallthru
        _
      %p190 = scmp.le.s32.totalorder 1, %s16
      %p191 = scmp.lt.s32.totalorder %s16, 3
      %p192 = pnand %p190, %p191
      %p193 = pneg %p192
      // Predicated region
      $region33: #{tpu_custom_call.1} parent=5 // pred_check
        _
      $region34: #{tpu_custom_call.1} parent=5 // pred_check_branch
        %195 = sbr.rel (%p192) target = $region36
      $region35: #{tpu_custom_call.1} parent=5 // pred_region
        %s196 = ssub.s32 %s16, 1
        %s197 = sand.u32 %s55, 1
        %s198 = scalar_lea.sflag [#allocation3], %s197
        %s199 = sand.u32 %s55, 1
        %s200 = smul.addr %s199, 16
        %s201 = scalar_lea.vmem [#allocation2], %s200
        // Predicated region
        $region37: #{tpu_custom_call.1} parent=35 // pred_check
          %p202 = pneg %p68
        $region38: #{tpu_custom_call.1} parent=35 // pred_check_branch
          %204 = sbr.rel (%p202) target = $region40
        $region39: #{tpu_custom_call.1} parent=35 // pred_region
          %205 = dma.done %s198, 256
        $region40: #{tpu_custom_call.1} parent=35 // pred_fallthru
          _
        %p206 = scmp.lt.s32.totalorder %s21, 1
        %s207 = scalar_select %p206, %s21, 1
        %s208 = smul.addr %s207, 2
        %s209 = smul.addr %s208, 8
        %s210 = scalar_lea.vmem %s0, %s209
        %p211 = pneg %p42
        %p212 = pneg %p39
        %s213 = sand.u32 %s55, 1
        %s214 = scalar_lea.sflag [#allocation3], %s213
        %s215 = sand.u32 %s55, 1
        %s216 = smul.addr %s215, 16
        %s217 = scalar_lea.vmem [#allocation2], %s216
        %p218 = pneg %p68
        %p219 = pneg %p65
        %p220 = pneg %p89
        %p221 = pneg %p86
        %p222 = pneg %p110
        %p223 = pneg %p107
        %p224 = pneg %p136
        %p225 = pneg %p133
        %s226 = sand.u32 %s123, 1
        %s227 = scalar_lea.sflag [#allocation4], %s226
        %s228 = sand.u32 %s123, 1
        %s229 = smul.addr %s228, 8
        %s230 = scalar_lea.vmem [#allocation5], %s229
        %p231 = scmp.lt.s32.totalorder %s21, 1
        %s232 = scalar_select %p231, %s21, 1
        %s233 = smul.addr %s232, 2
        %s234 = smul.addr %s233, 8
        %s235 = scalar_lea.vmem %s0, %s234
        %v236 = vld [vmem:[%s235] sm:$0xff]
        %v237 = vld [vmem:[%s235 + $0x8] sm:$0xff]
        %v238 = vld [vmem:[%s201] sm:$0xff]
        %v239 = vld [vmem:[%s201 + $0x8] sm:$0xff]
        %v240 = vld [vmem:[%s2] sm:$0xff]
        %v241 = vld [vmem:[%s2 + $0x8] sm:$0xff]
        %v242 = vld [vmem:[%s3] sm:$0xff]
        %v243 = vld [vmem:[%s3 + $0x8] sm:$0xff]
        %vm244 = vcmask 130048
        %v245 = vsel %vm244, %v236, -inf
        %246 = vmax.xlane.f32.xlu0 %v245
        %v247 = vpop.xlane.xlu0 %246
        %v248 = vsel %vm244, %v237, -inf
        %249 = vmax.xlane.f32.xlu0 %v248
        %v250 = vpop.xlane.xlu0 %249
        %v251 = vlaneseq
        %v252 = vand.u32 %v251, 127
        %vm253 = vcmp.eq.f32.partialorder %v236, %v247
        %vm254 = vcmp.eq.f32.partialorder %v237, %v250
        %v255 = vsel %vm253, %v252, 16
        %v256 = vsel %vm254, %v252, 16
        %v257 = vsel %vm244, %v255, 2147483647
        %v258 = vand.u32 %v257, 65535
        %v259 = vshra.s32 %v257, 16
        %v260 = vcvt.s32.f32 %v258
        %v261 = vcvt.s32.f32 %v259
        %262 = vmin.xlane.f32.xlu0 %v261
        %v263 = vpop.xlane.xlu0 %262
        %vm264 = vcmp.eq.f32.partialorder %v261, %v263
        %v265 = vsel %vm264, %v260, inf
        %266 = vmin.xlane.f32.xlu0 %v265
        %v267 = vpop.xlane.xlu0 %266
        %v268 = vcvt.f32.s32 %v267
        %v269 = vcvt.f32.s32 %v263
        %v270 = vshll.u32 %v269, 16
        %v271 = vadd.s32 %v270, %v268
        %v272 = vsel %vm244, %v256, 2147483647
        %v273 = vand.u32 %v272, 65535
        %v274 = vshra.s32 %v272, 16
        %v275 = vcvt.s32.f32 %v273
        %v276 = vcvt.s32.f32 %v274
        %277 = vmin.xlane.f32.xlu0 %v276
        %v278 = vpop.xlane.xlu0 %277
        %vm279 = vcmp.eq.f32.partialorder %v276, %v278
        %v280 = vsel %vm279, %v275, inf
        %281 = vmin.xlane.f32.xlu0 %v280
        %v282 = vpop.xlane.xlu0 %281
        %v283 = vcvt.f32.s32 %v282
        %v284 = vcvt.f32.s32 %v278
        %v285 = vshll.u32 %v284, 16
        %v286 = vadd.s32 %v285, %v283
        %vm287 = vcmp.eq.s32.totalorder %v252, %v271
        %vm288 = vcmp.eq.s32.totalorder %v252, %v286
        %v289 = vsel %vm287, -inf, %v236
        %v290 = vsel %vm288, -inf, %v237
        %v291 = vsel %vm244, %v289, -inf
        %292 = vmax.xlane.f32.xlu0 %v291
        %v293 = vpop.xlane.xlu0 %292
        %v294 = vsel %vm244, %v290, -inf
        %295 = vmax.xlane.f32.xlu0 %v294
        %v296 = vpop.xlane.xlu0 %295
        %v297 = vsel %vm287, %v293, %v247
        %v298 = vsel %vm288, %v296, %v250
        %300 = vset.pattern.permute.xlu0 0
        %301 = vperm.xlu0 %300, %v242
        %v302 = vpop.permute.xlu0 %301
        %305 = vset.pattern.permute.xlu0 0
        %306 = vperm.xlu0 %305, %v243
        %v307 = vpop.permute.xlu0 %306
        %v309 = vadd.f32 %v236, %v302
        %v310 = vadd.f32 %v237, %v307
        %v311 = vmax.f32 %v297, %v309
        %v312 = vmax.f32 %v298, %v310
        %v313 = vadd.f32 %v311, %v238
        %v314 = vadd.f32 %v312, %v239
        %316 = vset.pattern.permute.xlu0 0
        %317 = vperm.xlu0 %316, %v240
        %v318 = vpop.permute.xlu0 %317
        %321 = vset.pattern.permute.xlu0 0
        %322 = vperm.xlu0 %321, %v241
        %v323 = vpop.permute.xlu0 %322
        %v325 = vadd.f32 %v313, %v318
        %v326 = vadd.f32 %v314, %v323
        %v327 = vmax.f32 %v325, %v326
        %328 = vst.msk [vmem:[%s230] sm:$0xff] %vm244, %v327
        %s329 = sand.u32 %s123, 1
        %s330 = scalar_lea.sflag [#allocation4], %s329
        %s331 = sand.u32 %s123, 1
        %s332 = smul.addr %s331, 8
        %s333 = scalar_lea.vmem [#allocation5], %s332
        // Predicated region
        $region41: #{tpu_custom_call.1} parent=35 // pred_check
          %p334 = pneg %p133
        $region42: #{tpu_custom_call.1} parent=35 // pred_check_branch
          %336 = sbr.rel (%p334) target = $region44
        $region43: #{tpu_custom_call.1} parent=35 // pred_region
          %s338 = ssub.s32 128, 128
          %339 = vsyncadd %s330, %s338
          %s340 = smul.addr %s21, 128
          %s341 = scalar_lea.hbm %s4, %s340
          %s343 = sshll.u32 %s333, 4
          %s344 = int_to_ptr.vmem [resolvable:$true] %s343
          %346 = dma.vmem_to_hbm [thread:$0]  %s344, 128, %s341, %s330
        $region44: #{tpu_custom_call.1} parent=35 // pred_fallthru
          _
      $region36: #{tpu_custom_call.1} parent=5 // pred_fallthru
        _
      %p347 = scmp.le.s32.totalorder 2, %s16
      // Predicated region
      $region45: #{tpu_custom_call.1} parent=5 // pred_check
        %p348 = pneg %p347
      $region46: #{tpu_custom_call.1} parent=5 // pred_check_branch
        %350 = sbr.rel (%p348) target = $region48
      $region47: #{tpu_custom_call.1} parent=5 // pred_region
        %s351 = ssub.s32 %s16, 2
        // Predicated region
        $region49: #{tpu_custom_call.1} parent=47 // pred_check
          %p352 = pneg %p139
        $region50: #{tpu_custom_call.1} parent=47 // pred_check_branch
          %354 = sbr.rel (%p352) target = $region52
        $region51: #{tpu_custom_call.1} parent=47 // pred_region
          %s355 = sand.u32 %s124, 1
          %s356 = scalar_lea.sflag [#allocation4], %s355
          %s357 = sand.u32 %s124, 1
          %s358 = smul.addr %s357, 8
          %s359 = scalar_lea.vmem [#allocation5], %s358
          %360 = dma.done %s356, 128
        $region52: #{tpu_custom_call.1} parent=47 // pred_fallthru
          _
      $region48: #{tpu_custom_call.1} parent=5 // pred_fallthru
        _
    $region6: #{tpu_custom_call.1} parent=1 // loop_footer
      %s20 = sadd.s32 1, %s16
    $region7: #{tpu_custom_call.1} parent=1 // loop_footer_branch
      %15 = sbr.rel target = $region3
    $region8: #{tpu_custom_call.1} parent=1 // loop_exit
      _
    %361 = vsyncpa [#allocation3], 1
    %s362 = scalar_lea.sflag [#allocation3], 1
    %363 = vsyncpa %s362, 1
    %364 = vsyncpa [#allocation4], 1
    %s365 = scalar_lea.sflag [#allocation4], 1
    %366 = vsyncpa %s365, 1

</llo_original>
